<compile_context>
chip_gen: v6e
topology: v6e:2x2x1
jax: 0.10.0
libtpu: 0.0.40
codegen_flags: <defaults>
</compile_context>

<pallas_src>
import jax
import jax.numpy as jnp
from jax.experimental import pallas as pl
from jax.experimental.pallas import tpu as pltpu


_LANES = 1024  # lane-dense width (multiple of 128)


# ----------------------------- Pallas kernel -------------------------------

def _neg_scale_kernel(lam_ref, g_ref, o_ref):
    # backward hot path: grad_in = (-lambda) * grad_out
    # lam_ref is a (1,) f32 scalar in SMEM (runtime value, no retrace on change)
    g = g_ref[...]
    o_ref[...] = g * lam_ref[0].astype(g.dtype)


# ------------------------------ tiling helpers ------------------------------

def _sublane_multiple(dtype):
    itemsize = jnp.dtype(dtype).itemsize
    if itemsize >= 4:
        return 8
    if itemsize == 2:
        return 16
    return 32


def _device_tile_bytes():
    """Per-block byte target, gated by TPU generation."""
    try:
        kind = jax.devices()[0].device_kind.lower()
    except Exception:
        kind = ""
    if "v7" in kind:
        return 8 << 20   # v7x: ~3.2 TB/s per TC -> amortize per-step overhead
    if "v5e" in kind or "v5 lite" in kind or "v5lite" in kind:
        return 2 << 20   # v5e: 16 MiB default scoped VMEM; 2 MiB is plenty
    return 4 << 20       # v6e / default


def _split_even(total_units, target_units):
    """Pick (units_per_block, grid) for `total_units` granules.

    Blocks stay <= target_units granules; the grid is forced to >= 2 (and even
    where integer block sizes allow) so v7x's two TensorCores both get work.
    Odd grids can still occur for awkward sizes; that only costs a 2/1
    imbalance on v7x, never correctness.
    """
    if total_units <= 1:
        return total_units, 1
    nb = max(2, pl.cdiv(total_units, target_units))
    if nb % 2:
        nb += 1
    upb = pl.cdiv(total_units, nb)
    grid = pl.cdiv(total_units, upb)
    return upb, grid


# ------------------------------- wrapper ------------------------------------

def _neg_scale_pallas(lambda_, g):
    """Compute (-lambda_) * g with a lane-dense, tiled elementwise kernel."""
    dtype = g.dtype
    n = int(g.size)
    if n == 0:
        return g

    itemsize = jnp.dtype(dtype).itemsize
    sub = _sublane_multiple(dtype)
    tile_bytes = _device_tile_bytes()

    # runtime SMEM scalar: -lambda (f32). No trace-time baking -> no retrace
    # when the decay schedule changes the value.
    neg_lam = (-jnp.asarray(lambda_, dtype=jnp.float32)).reshape((1,))

    cost = pl.CostEstimate(flops=n, transcendentals=0,
                           bytes_accessed=2 * n * itemsize)
    cparams = pltpu.CompilerParams(
        dimension_semantics=("parallel",),
        # double-buffered in+out = 4x block, plus headroom; <= ~40 MiB on v7x
        vmem_limit_bytes=min(4 * tile_bytes + (8 << 20), 48 << 20))

    if n % _LANES == 0:
        # Zero-copy lane-dense 2-D slab: full 128-lane vst, no masking except
        # possibly the ragged last row-block.
        rows = n // _LANES
        g2d = g.reshape(rows, _LANES)
        target_units = max(1, tile_bytes // (_LANES * itemsize * sub))
        upb, grid = _split_even(pl.cdiv(rows, sub), target_units)
        tr = rows if grid == 1 else upb * sub  # full extent or sublane multiple
        out = pl.pallas_call(
            _neg_scale_kernel,
            out_shape=jax.ShapeDtypeStruct((rows, _LANES), dtype),
            grid=(grid,),
            in_specs=[pl.BlockSpec(memory_space=pltpu.MemorySpace.SMEM),
                      pl.BlockSpec((tr, _LANES), lambda i: (i, 0))],
            out_specs=pl.BlockSpec((tr, _LANES), lambda i: (i, 0)),
            input_output_aliases={1: 0},      # reuse grad_out buffer
            compiler_params=cparams,
            cost_estimate=cost,
        )(neg_lam, g2d)
        return out.reshape(g.shape)

    # Ragged size: flat 1-D view. Block is a multiple of sub*1024 elements and
    # Pallas masks the ragged last block -> no jnp.pad / trailing-slice copies.
    flat = g.reshape(-1)
    granule = sub * _LANES
    target_units = max(1, tile_bytes // (granule * itemsize))
    upb, grid = _split_even(pl.cdiv(n, granule), target_units)
    blk = n if grid == 1 else upb * granule
    out = pl.pallas_call(
        _neg_scale_kernel,
        out_shape=jax.ShapeDtypeStruct((n,), dtype),
        grid=(grid,),
        in_specs=[pl.BlockSpec(memory_space=pltpu.MemorySpace.SMEM),
                  pl.BlockSpec((blk,), lambda i: (i,))],
        out_specs=pl.BlockSpec((blk,), lambda i: (i,)),
        input_output_aliases={1: 0},
        compiler_params=cparams,
        cost_estimate=cost,
    )(neg_lam, flat)
    return out.reshape(g.shape)


# ------------------------ G_decay module equivalent --------------------------

@jax.custom_vjp
def _g_decay_core(x, lambda_):
    # forward is a view (identity): no kernel, no copy.
    return x


def _g_decay_fwd(x, lambda_):
    return x, lambda_


def _g_decay_bwd(lambda_, grad_out):
    # grad wrt x = -lambda * grad_out ; grad wrt lambda = 0 (PyTorch returns None)
    return _neg_scale_pallas(lambda_, grad_out), jnp.zeros_like(lambda_)


_g_decay_core.defvjp(_g_decay_fwd, _g_decay_bwd)


def g_decay(x, lambda_):
    """Forward: identity (view semantics). Backward: grad_in = -lambda * grad_out."""
    lam = jnp.asarray(lambda_, dtype=jnp.float32)
    return _g_decay_core(x, lam)


class GDecay:
    """JAX/Pallas port of the PyTorch G_decay module."""

    def __init__(self, lambda_=0.0):
        self.lambda_ = jnp.asarray(lambda_, dtype=jnp.float32)

    def set_lambda(self, lambda_):
        # lambda is a runtime operand (SMEM scalar): changing it does NOT retrace.
        self.lambda_ = jnp.asarray(lambda_, dtype=jnp.float32)

    def __call__(self, x):
        return g_decay(x, self.lambda_)


# --------------------------------- main --------------------------------------

if __name__ == "__main__":
    key = jax.random.PRNGKey(0)
    k0, k1, k2, k3, k4 = jax.random.split(key, 5)

    # NCHW input, consistent with the PyTorch module's typical conv-feature use.
    x = jax.random.normal(k0, (2, 4, 16, 16), dtype=jnp.float32)
    mod = GDecay(lambda_=0.5)

    # Forward: exact identity (view semantics -> no kernel, no copy).
    y = mod(x)
    jax.block_until_ready(y)
    assert y.shape == x.shape and y.dtype == x.dtype
    assert bool(jnp.all(y == x))

    # Backward: grad wrt x must be -lambda * upstream grad.
    loss_fn = lambda a: jnp.sum(mod(a) * 2.0)
    g = jax.grad(loss_fn)(x)
    jax.block_until_ready(g)
    assert bool(jnp.allclose(g, jnp.full_like(x, -1.0), atol=1e-6))

    # Change lambda: value is a runtime SMEM scalar, so no retrace is needed.
    mod.set_lambda(0.125)
    g2 = jax.grad(loss_fn)(x)
    jax.block_until_ready(g2)
    assert bool(jnp.allclose(g2, jnp.full_like(x, -0.25), atol=1e-6))

    # 1024-aligned multi-block case (2-D lane-dense path, even grid for v7x).
    xa = jax.random.normal(k1, (4, 64, 1024), dtype=jnp.float32)
    cta = jax.random.normal(k2, xa.shape, xa.dtype)
    expa = -0.3 * cta
    _, vjp_a = jax.vjp(lambda a: g_decay(a, 0.3), xa)
    (gxa,) = vjp_a(cta)
    jax.block_until_ready(gxa)
    assert bool(jnp.allclose(gxa, expa, atol=1e-5, rtol=1e-5))

    # Ragged (not a multiple of 1024): flat 1-D path, Pallas-masked last block,
    # no pad/slice HBM round trips.
    xr = jax.random.normal(k3, (4, 16, 97, 89), dtype=jnp.float32)
    ctr = jax.random.normal(k4, xr.shape, xr.dtype)
    expr = -0.3 * ctr
    _, vjp_r = jax.vjp(lambda a: g_decay(a, 0.3), xr)
    (gxr,) = vjp_r(ctr)
    jax.block_until_ready(gxr)
    assert bool(jnp.allclose(gxr, expr, atol=1e-5, rtol=1e-5))

    # bf16 grads (native-bf16 multiply, ragged single full-extent 1-D block).
    xb = jax.random.normal(k1, (2, 8, 14, 14), dtype=jnp.bfloat16)
    _, vjp_b = jax.vjp(lambda a: g_decay(a, 0.25), xb)
    ctb = jnp.ones_like(xb)
    (gxb,) = vjp_b(ctb)
    jax.block_until_ready(gxb)
    refb = (ctb.astype(jnp.float32) * -0.25).astype(jnp.bfloat16)
    assert bool(jnp.allclose(gxb.astype(jnp.float32),
                             refb.astype(jnp.float32), atol=1e-2))

    print("KERNEL_OK")
</pallas_src>

<mosaic_0001>
module attributes {stable_mosaic.version = 11 : i64} {
  func.func @_neg_scale_kernel(%arg0: i32, %arg1: memref<1xf32, #tpu.memory_space<smem>>, %arg2: memref<2x1024xf32, #tpu.memory_space<vmem>>, %arg3: memref<2x1024xf32, #tpu.memory_space<vmem>>) attributes {dimension_semantics = [#tpu.dimension_semantics<parallel>], iteration_bounds = array<i64: 1>, scalar_prefetch = 0 : i64, scratch_operands = 0 : i64, tpu.core_type = #tpu.core_type<tc>, window_params = [{transform_indices = @transform_0, window_bounds = array<i64: 1>}, {transform_indices = @transform_1, window_bounds = array<i64: 2, 1024>}, {transform_indices = @transform_2, window_bounds = array<i64: 2, 1024>}]} {
    %c0 = arith.constant 0 : index
    %c0_0 = arith.constant 0 : index
    %0 = vector.load %arg2[%c0, %c0_0] : memref<2x1024xf32, #tpu.memory_space<vmem>>, vector<2x1024xf32>
    %c0_1 = arith.constant 0 : index
    %1 = memref.load %arg1[%c0_1] : memref<1xf32, #tpu.memory_space<smem>>
    %2 = vector.broadcast %1 : f32 to vector<2x1024xf32>
    %3 = arith.mulf %0, %2 : vector<2x1024xf32>
    %c0_2 = arith.constant 0 : index
    %c0_3 = arith.constant 0 : index
    %4 = vector.load %arg3[%c0_2, %c0_3] : memref<2x1024xf32, #tpu.memory_space<vmem>>, vector<2x1024xf32>
    tpu.vector_store %arg3[%c0_2, %c0_3], %3 {strides = array<i32>} : memref<2x1024xf32, #tpu.memory_space<vmem>>, vector<2x1024xf32>,
    return
  }
  func.func @transform_0(%arg0: i32) -> i32 {
    %c0_i32 = arith.constant 0 : i32
    %c0_i32_0 = arith.constant 0 : i32
    return %c0_i32 : i32
  }
  func.func @transform_1(%arg0: i32) -> (i32, i32) {
    %c0_i32 = arith.constant 0 : i32
    %c0_i32_0 = arith.constant 0 : i32
    return %arg0, %c0_i32 : i32, i32
  }
  func.func @transform_2(%arg0: i32) -> (i32, i32) {
    %c0_i32 = arith.constant 0 : i32
    %c0_i32_0 = arith.constant 0 : i32
    return %arg0, %c0_i32 : i32, i32
  }
}

</mosaic_0001>

<llo_original>
// kernel: tpu_custom_call.1
$region0: #{tpu_custom_call.1}
  #allocation0 [shape = 'u32[]', space=smem, size = 0x4, offset = 0x4, fixed_abs, tag = 'smem constant byte address 0x4 - core index']
  #allocation1 [shape = 'u32[144,128]{1,0:T(1,128)}', space=vmem, size = 0x12000, scoped, tag = 'internal scratch']
  #allocation2 [shape = 'f32[1]{0:T(128)S(6)}', space=smem, size = 0x200, scoped, tag = 'scoped memory for tpu_custom_call.1']
  %s0 = inlined_call_operand.<no memory space> [shape: f32[1], index: 0, kind: input, shape index: {}]
  %s1 = inlined_call_operand.hbm [shape: f32[2,1024], index: 1, kind: input, shape index: {}, may-alias: {1,2}]
  %s2 = inlined_call_operand.hbm [shape: f32[2,1024], index: 2, kind: output, shape index: {}, may-alias: {1,2}]
  %s3 = sld [smem:[#allocation0]]
  $region22: #{tpu_custom_call.1} parent=0
    _
  %s5 = ssub.s32 1, %s3
  %s6 = scalar_select 0, %s5, %s3
  %7 = sst [smem:[#allocation2]] %s0
  $region1: #{tpu_custom_call.1} parent=0
    #allocation3 [shape = 'u8[8192]{0}', space=vmem, size = 0x2000, scoped, tag = 'input window, operand 1, single buffered']
    #allocation4 [shape = 's32[1]{0}', space=sflag, size = 0x4, scoped, tag = 'scoped memory for tpu_custom_call.1']
    #allocation5 [shape = 's32[1]{0}', space=sflag, size = 0x4, scoped, tag = 'scoped memory for tpu_custom_call.1']
    #allocation6 [shape = 'u8[8192]{0}', space=vmem, size = 0x2000, scoped, tag = 'output window, operand 0, single buffered']
    %8 = vsyncpa [#allocation4], 0
    %9 = vsyncpa [#allocation5], 0
    // Predicated region
    $region2: #{tpu_custom_call.1} parent=1 // pred_check
      _
    $region3: #{tpu_custom_call.1} parent=1 // pred_check_branch
      %11 = sbr.rel (0) target = $region5
    $region4: #{tpu_custom_call.1} parent=1 // pred_region
      _
    $region5: #{tpu_custom_call.1} parent=1 // pred_fallthru
      _
    // Predicated region
    $region6: #{tpu_custom_call.1} parent=1 // pred_check
      _
    $region7: #{tpu_custom_call.1} parent=1 // pred_check_branch
      %13 = sbr.rel (0) target = $region9
    $region8: #{tpu_custom_call.1} parent=1 // pred_region
      %s15 = ssub.s32 256, 256
      %16 = vsyncadd [#allocation4], %s15
      %s18 = sshll.u32 [#allocation3], 4
      %s19 = int_to_ptr.vmem [resolvable:$true] %s18
      %21 = dma.hbm_to_vmem [thread:$0]  %s1, 256, %s19, [#allocation4]
    $region9: #{tpu_custom_call.1} parent=1 // pred_fallthru
      _
    // Predicated region
    $region10: #{tpu_custom_call.1} parent=1 // pred_check
      _
    $region11: #{tpu_custom_call.1} parent=1 // pred_check_branch
      %23 = sbr.rel (0) target = $region13
    $region12: #{tpu_custom_call.1} parent=1 // pred_region
      %24 = dma.done [#allocation4], 256
    $region13: #{tpu_custom_call.1} parent=1 // pred_fallthru
      _
    %v25 = vld [vmem:[#allocation3] sm:$0xff]
    %v26 = vld [vmem:[#allocation3 + $0x8] sm:$0xff]
    %s27 = sld [smem:[#allocation2]]
    %v28 = vstv %s27
    %v29 = vmul.f32 %v25, %v28
    %v30 = vmul.f32 %v26, %v28
    %31 = vst [vmem:[#allocation6] sm:$0xff] %v29
    %32 = vst [vmem:[#allocation6 + $0x8] sm:$0xff] %v30
    // Predicated region
    $region14: #{tpu_custom_call.1} parent=1 // pred_check
      _
    $region15: #{tpu_custom_call.1} parent=1 // pred_check_branch
      %34 = sbr.rel (0) target = $region17
    $region16: #{tpu_custom_call.1} parent=1 // pred_region
      %s36 = ssub.s32 256, 256
      %37 = vsyncadd [#allocation5], %s36
      %s39 = sshll.u32 [#allocation6], 4
      %s40 = int_to_ptr.vmem [resolvable:$true] %s39
      %42 = dma.vmem_to_hbm [thread:$0]  %s40, 256, %s2, [#allocation5]
    $region17: #{tpu_custom_call.1} parent=1 // pred_fallthru
      _
    // Predicated region
    $region18: #{tpu_custom_call.1} parent=1 // pred_check
      _
    $region19: #{tpu_custom_call.1} parent=1 // pred_check_branch
      %44 = sbr.rel (0) target = $region21
    $region20: #{tpu_custom_call.1} parent=1 // pred_region
      %45 = dma.done [#allocation5], 256
    $region21: #{tpu_custom_call.1} parent=1 // pred_fallthru
      _
    %46 = vsyncpa [#allocation4], 1
    %47 = vsyncpa [#allocation5], 1

</llo_original>
